<compile_context>
chip_gen: v7x
topology: tpu7x:2x2x1
jax: 0.10.0
libtpu: 0.0.40
codegen_flags: <defaults>
</compile_context>

<pallas_src>
import jax
import jax.numpy as jnp
from jax.experimental import pallas as pl
from jax.experimental.pallas import tpu as pltpu

PAD = 128  # lane-padded feature width for all input/hidden/output channels


# ----------------------------- Pallas kernel ------------------------------ #

def _fused_gcn_kernel(a_ref, x_ref, w_ref, b_ref, o_ref):
    """Fused 3-layer GCN forward, everything VMEM-resident.

    a_ref : (N, N)        f32   normalized adjacency A_hat
    x_ref : (N, 128)      bf16  lane-padded node features
    w_ref : (3, 128, 128) bf16  packed lane-padded weights (zero-padded)
    b_ref : (3, 128)      f32   packed lane-padded biases, one row per layer
    o_ref : (N, 128)      f32   lane-dense output slab; column 0 is the answer
    """
    a = a_ref[...]          # (N, N) f32, loaded once, reused by all 3 layers
    b = b_ref[...]          # (3, 128) f32, loaded once, sliced in-register

    # ---- layer 1: h = relu(A @ (X @ W1) + b1) ----
    xw = jnp.dot(x_ref[...], w_ref[0], preferred_element_type=jnp.float32)
    h = jnp.dot(a, xw, preferred_element_type=jnp.float32)
    h = jnp.maximum(h + b[0:1, :], 0.0)

    # ---- layer 2: h = relu(A @ (h @ W2) + b2) ----
    hw = jnp.dot(h.astype(jnp.bfloat16), w_ref[1],
                 preferred_element_type=jnp.float32)
    h = jnp.dot(a, hw, preferred_element_type=jnp.float32)
    h = jnp.maximum(h + b[1:2, :], 0.0)

    # ---- layer 3 (no relu): out = A @ (h @ W3) + b3 ----
    hw = jnp.dot(h.astype(jnp.bfloat16), w_ref[2],
                 preferred_element_type=jnp.float32)
    out = jnp.dot(a, hw, preferred_element_type=jnp.float32)

    o_ref[...] = (out + b[2:3, :]).astype(o_ref.dtype)  # padded cols stay 0


def fused_gcn(a_hat, x_pad, w_all, b_all):
    """Single pallas_call for the whole 3-layer forward. Returns (N,)."""
    n = x_pad.shape[0]
    vmem = pl.BlockSpec(memory_space=pltpu.MemorySpace.VMEM)
    out_pad = pl.pallas_call(
        _fused_gcn_kernel,
        out_shape=jax.ShapeDtypeStruct((n, PAD), jnp.float32),
        in_specs=[vmem] * 4,
        out_specs=vmem,
    )(a_hat, x_pad, w_all, b_all)
    return out_pad[:, 0]   # last layer has 1 channel -> flatten to (N,)


# ------------------------------ Glue (JAX) -------------------------------- #

def build_normalized_adjacency(edge_index, num_nodes):
    """Dense equivalent of PyG GCNConv normalization:
    A_hat[i, j] = (A + I)[i, j] * d_i^-1/2 * d_j^-1/2, edges flow src->dst,
    d = in-degree including self loop.  Built with a one-hot matmul (MXU)
    rather than an XLA scatter, which serializes per edge on TPU."""
    src = edge_index[0]
    dst = edge_index[1]
    dst_onehot = jax.nn.one_hot(dst, num_nodes, dtype=jnp.float32)  # (E, N)
    src_onehot = jax.nn.one_hot(src, num_nodes, dtype=jnp.float32)  # (E, N)
    adj = dst_onehot.T @ src_onehot              # adj[i, j] = #edges j -> i
    adj = adj + jnp.eye(num_nodes, dtype=jnp.float32)   # add self loops
    deg = adj.sum(axis=1)
    d_inv_sqrt = jnp.where(deg > 0, 1.0 / jnp.sqrt(deg), 0.0)
    return d_inv_sqrt[:, None] * adj * d_inv_sqrt[None, :]


def _pad_2d(w, rows, cols, dtype):
    """Zero-pad a weight matrix to (rows, cols) in the given dtype."""
    out = jnp.zeros((rows, cols), dtype)
    return out.at[: w.shape[0], : w.shape[1]].set(w.astype(dtype))


def _pad_1d(b, cols):
    """Zero-pad a bias vector to (cols,) f32."""
    return jnp.zeros((cols,), jnp.float32).at[: b.shape[0]].set(b)


def init_gcn_params(key, num_node_features):
    """Glorot-uniform weights / small biases, matching GCNConv shapes."""
    dims = [(num_node_features, 48), (48, 60), (60, 1)]
    params = []
    for i, (fan_in, fan_out) in enumerate(dims):
        k = jax.random.fold_in(key, i)
        kw, kb = jax.random.split(k)
        limit = jnp.sqrt(6.0 / (fan_in + fan_out))
        w = jax.random.uniform(kw, (fan_in, fan_out), jnp.float32, -limit, limit)
        b = 0.1 * jax.random.normal(kb, (fan_out,), jnp.float32)  # exercise bias path
        params.append((w, b))
    return params


def prepare_params(params):
    """One-time parameter prep: pack lane-padded bf16 weights and f32 biases.

    Done ONCE outside the per-call path so the forward only prepares A_hat / X.
    """
    (w1, b1), (w2, b2), (w3, b3) = params
    w_all = jnp.stack([
        _pad_2d(w1, PAD, PAD, jnp.bfloat16),   # (128, 128), rows 8  valid
        _pad_2d(w2, PAD, PAD, jnp.bfloat16),   # (128, 128), rows 48 valid
        _pad_2d(w3, PAD, PAD, jnp.bfloat16),   # (128, 128), rows 60 valid
    ])                                          # (3, 128, 128) bf16
    b_all = jnp.stack([_pad_1d(b1, PAD), _pad_1d(b2, PAD), _pad_1d(b3, PAD)])
    return w_all, b_all                         # (3, 128) f32


@jax.jit
def gcn_model_forward(w_all, b_all, x, edge_index):
    """forward: x = relu(conv1) -> relu(conv2) -> conv3 -> flatten, fused kernel."""
    n, f = x.shape
    a_hat = build_normalized_adjacency(edge_index, n)            # f32, per call
    x_pad = jnp.zeros((n, PAD), jnp.bfloat16).at[:, :f].set(x.astype(jnp.bfloat16))
    return fused_gcn(a_hat, x_pad, w_all, b_all)


# --------------------------------- Main ------------------------------------ #

if __name__ == "__main__":
    key = jax.random.PRNGKey(0)
    k_x, k_e, k_p = jax.random.split(key, 3)

    num_nodes = 16
    num_node_features = 8
    num_edges = 40

    x = jax.random.normal(k_x, (num_nodes, num_node_features), jnp.float32)
    edge_index = jax.random.randint(k_e, (2, num_edges), 0, num_nodes, jnp.int32)

    params = init_gcn_params(k_p, num_node_features)
    w_all, b_all = prepare_params(params)       # one-time packing, outside jit path

    out = gcn_model_forward(w_all, b_all, x, edge_index)
    out = jax.block_until_ready(out)

    assert out.shape == (num_nodes,), out.shape
    assert bool(jnp.all(jnp.isfinite(out)))

    # Pure-JAX f32 reference of the module math.  The kernel uses bf16 weight
    # operands with f32 accumulation, hence the modest tolerance.
    a_hat = build_normalized_adjacency(edge_index, num_nodes)
    (w1, b1), (w2, b2), (w3, b3) = params
    ref = jax.nn.relu(a_hat @ (x @ w1) + b1)
    ref = jax.nn.relu(a_hat @ (ref @ w2) + b2)
    ref = (a_hat @ (ref @ w3) + b3).flatten()
    max_err = float(jnp.max(jnp.abs(out - ref)))
    assert jnp.allclose(out, ref, atol=2e-2, rtol=2e-2), max_err

    print("KERNEL_OK")
</pallas_src>

<mosaic_0001>
module attributes {stable_mosaic.version = 11 : i64} {
  func.func @_fused_gcn_kernel(%arg0: memref<16x16xf32, #tpu.memory_space<vmem>>, %arg1: memref<16x128xbf16, #tpu.memory_space<vmem>>, %arg2: memref<3x128x128xbf16, #tpu.memory_space<vmem>>, %arg3: memref<3x128xf32, #tpu.memory_space<vmem>>, %arg4: memref<16x128xf32, #tpu.memory_space<vmem>>) attributes {dimension_semantics = [], scalar_prefetch = 0 : i64, scratch_operands = 0 : i64, tpu.core_type = #tpu.core_type<tc>} {
    %c0 = arith.constant 0 : index
    %c0_0 = arith.constant 0 : index
    %0 = vector.load %arg0[%c0, %c0_0] : memref<16x16xf32, #tpu.memory_space<vmem>>, vector<16x16xf32>
    %c0_1 = arith.constant 0 : index
    %c0_2 = arith.constant 0 : index
    %1 = vector.load %arg3[%c0_1, %c0_2] : memref<3x128xf32, #tpu.memory_space<vmem>>, vector<3x128xf32>
    %c0_3 = arith.constant 0 : index
    %c0_4 = arith.constant 0 : index
    %2 = vector.load %arg1[%c0_3, %c0_4] : memref<16x128xbf16, #tpu.memory_space<vmem>>, vector<16x128xbf16>
    %c0_5 = arith.constant 0 : index
    %c0_6 = arith.constant 0 : index
    %c0_7 = arith.constant 0 : index
    %3 = vector.load %arg2[%c0_5, %c0_6, %c0_7] : memref<3x128x128xbf16, #tpu.memory_space<vmem>>, vector<1x128x128xbf16>
    %4 = vector.shape_cast %3 : vector<1x128x128xbf16> to vector<128x128xbf16>
    %cst = arith.constant dense<0.000000e+00> : vector<16x128xf32>
    %5 = tpu.matmul %2, %4, %cst {dimension_numbers = #tpu.dot_dimension_numbers<[1], [0], [0], [1], [0, 0, 1, 1], [], []>} : vector<16x128xbf16>, vector<128x128xbf16>, vector<16x128xf32> -> vector<16x128xf32>
    %cst_8 = arith.constant dense<0.000000e+00> : vector<16x128xf32>
    %6 = tpu.matmul %0, %5, %cst_8 {dimension_numbers = #tpu.dot_dimension_numbers<[1], [0], [0], [1], [0, 0, 1, 1], [], []>} : vector<16x16xf32>, vector<16x128xf32>, vector<16x128xf32> -> vector<16x128xf32>
    %7 = vector.extract_strided_slice %1 {offsets = [0, 0], sizes = [1, 128], strides = [1, 1]} : vector<3x128xf32> to vector<1x128xf32>
    %8 = vector.broadcast %7 : vector<1x128xf32> to vector<16x128xf32>
    %9 = arith.addf %6, %8 : vector<16x128xf32>
    %cst_9 = arith.constant 0.000000e+00 : f32
    %10 = vector.broadcast %cst_9 : f32 to vector<16x128xf32>
    %11 = arith.maximumf %9, %10 : vector<16x128xf32>
    %12 = arith.truncf %11 : vector<16x128xf32> to vector<16x128xbf16>
    %c1 = arith.constant 1 : index
    %c0_10 = arith.constant 0 : index
    %c0_11 = arith.constant 0 : index
    %13 = vector.load %arg2[%c1, %c0_10, %c0_11] : memref<3x128x128xbf16, #tpu.memory_space<vmem>>, vector<1x128x128xbf16>
    %14 = vector.shape_cast %13 : vector<1x128x128xbf16> to vector<128x128xbf16>
    %cst_12 = arith.constant dense<0.000000e+00> : vector<16x128xf32>
    %15 = tpu.matmul %12, %14, %cst_12 {dimension_numbers = #tpu.dot_dimension_numbers<[1], [0], [0], [1], [0, 0, 1, 1], [], []>} : vector<16x128xbf16>, vector<128x128xbf16>, vector<16x128xf32> -> vector<16x128xf32>
    %cst_13 = arith.constant dense<0.000000e+00> : vector<16x128xf32>
    %16 = tpu.matmul %0, %15, %cst_13 {dimension_numbers = #tpu.dot_dimension_numbers<[1], [0], [0], [1], [0, 0, 1, 1], [], []>} : vector<16x16xf32>, vector<16x128xf32>, vector<16x128xf32> -> vector<16x128xf32>
    %17 = vector.extract_strided_slice %1 {offsets = [1, 0], sizes = [1, 128], strides = [1, 1]} : vector<3x128xf32> to vector<1x128xf32>
    %18 = vector.broadcast %17 : vector<1x128xf32> to vector<16x128xf32>
    %19 = arith.addf %16, %18 : vector<16x128xf32>
    %cst_14 = arith.constant 0.000000e+00 : f32
    %20 = vector.broadcast %cst_14 : f32 to vector<16x128xf32>
    %21 = arith.maximumf %19, %20 : vector<16x128xf32>
    %22 = arith.truncf %21 : vector<16x128xf32> to vector<16x128xbf16>
    %c2 = arith.constant 2 : index
    %c0_15 = arith.constant 0 : index
    %c0_16 = arith.constant 0 : index
    %23 = vector.load %arg2[%c2, %c0_15, %c0_16] : memref<3x128x128xbf16, #tpu.memory_space<vmem>>, vector<1x128x128xbf16>
    %24 = vector.shape_cast %23 : vector<1x128x128xbf16> to vector<128x128xbf16>
    %cst_17 = arith.constant dense<0.000000e+00> : vector<16x128xf32>
    %25 = tpu.matmul %22, %24, %cst_17 {dimension_numbers = #tpu.dot_dimension_numbers<[1], [0], [0], [1], [0, 0, 1, 1], [], []>} : vector<16x128xbf16>, vector<128x128xbf16>, vector<16x128xf32> -> vector<16x128xf32>
    %cst_18 = arith.constant dense<0.000000e+00> : vector<16x128xf32>
    %26 = tpu.matmul %0, %25, %cst_18 {dimension_numbers = #tpu.dot_dimension_numbers<[1], [0], [0], [1], [0, 0, 1, 1], [], []>} : vector<16x16xf32>, vector<16x128xf32>, vector<16x128xf32> -> vector<16x128xf32>
    %27 = vector.extract_strided_slice %1 {offsets = [2, 0], sizes = [1, 128], strides = [1, 1]} : vector<3x128xf32> to vector<1x128xf32>
    %28 = vector.broadcast %27 : vector<1x128xf32> to vector<16x128xf32>
    %29 = arith.addf %26, %28 : vector<16x128xf32>
    %c0_19 = arith.constant 0 : index
    %c0_20 = arith.constant 0 : index
    %30 = vector.load %arg4[%c0_19, %c0_20] : memref<16x128xf32, #tpu.memory_space<vmem>>, vector<16x128xf32>
    tpu.vector_store %arg4[%c0_19, %c0_20], %29 {strides = array<i32>} : memref<16x128xf32, #tpu.memory_space<vmem>>, vector<16x128xf32>,
    return
  }
}

</mosaic_0001>

<llo_original>
// kernel: gcn_model_forward.1
$region0: #{gcn_model_forward.1}
  #allocation0 [shape = 'u32[]', space=smem, size = 0x4, offset = 0x4, fixed_abs, tag = 'smem constant byte address 0x4 - core index']
  #allocation1 [shape = 'u32[144,128]{1,0:T(1,128)}', space=vmem, size = 0x12000, scoped, tag = 'internal scratch']
  %s0 = inlined_call_operand.vmem [shape: f32[16,16], index: 0, kind: input, shape index: {}]
  %s1 = inlined_call_operand.vmem [shape: bf16[16,128], index: 1, kind: input, shape index: {}]
  %s2 = inlined_call_operand.vmem [shape: bf16[3,128,128], index: 2, kind: input, shape index: {}]
  %s3 = inlined_call_operand.vmem [shape: f32[3,128], index: 3, kind: input, shape index: {}]
  %s4 = inlined_call_operand.vmem [shape: f32[16,128], index: 4, kind: output, shape index: {}]
  %s5 = sld [smem:[#allocation0]]
  $region26: #{gcn_model_forward.1} parent=0
    _
  %s7 = ssub.s32 1, %s5
  %s8 = scalar_select 0, %s7, %s5
  // Predicated region
  $region2: #{gcn_model_forward.1} parent=0 // pred_check
    _
  $region3: #{gcn_model_forward.1} parent=0 // pred_check_branch
    %10 = sbr.rel (0) target = $region5
  $region4: #{gcn_model_forward.1} parent=0 // pred_region
    _
  $region5: #{gcn_model_forward.1} parent=0 // pred_fallthru
    _
  // Predicated region
  $region6: #{gcn_model_forward.1} parent=0 // pred_check
    _
  $region7: #{gcn_model_forward.1} parent=0 // pred_check_branch
    %12 = sbr.rel (0) target = $region9
  $region8: #{gcn_model_forward.1} parent=0 // pred_region
    _
  $region9: #{gcn_model_forward.1} parent=0 // pred_fallthru
    _
  // Predicated region
  $region10: #{gcn_model_forward.1} parent=0 // pred_check
    _
  $region11: #{gcn_model_forward.1} parent=0 // pred_check_branch
    %14 = sbr.rel (0) target = $region13
  $region12: #{gcn_model_forward.1} parent=0 // pred_region
    _
  $region13: #{gcn_model_forward.1} parent=0 // pred_fallthru
    _
  // Predicated region
  $region14: #{gcn_model_forward.1} parent=0 // pred_check
    _
  $region15: #{gcn_model_forward.1} parent=0 // pred_check_branch
    %16 = sbr.rel (0) target = $region17
  $region16: #{gcn_model_forward.1} parent=0 // pred_region
    _
  $region17: #{gcn_model_forward.1} parent=0 // pred_fallthru
    _
  %v18 = vld [vmem:[%s0] sm:$0xff]
  %v19 = vld [vmem:[%s0 + $0x8] sm:$0xff]
  %v20 = vld [vmem:[%s3] sm:$0x7]
  %v21 = vld [vmem:[%s1] sm:$0xf]
  %v22 = vld [vmem:[%s1 + $0x4] sm:$0xf]
  %v23 = vld [vmem:[%s2] sm:$0xf]
  %v24 = vld [vmem:[%s2 + $0x4] sm:$0xf]
  %v25 = vld [vmem:[%s2 + $0x8] sm:$0xf]
  %v26 = vld [vmem:[%s2 + $0xc] sm:$0xf]
  %v27 = vld [vmem:[%s2 + $0x10] sm:$0xf]
  %v28 = vld [vmem:[%s2 + $0x14] sm:$0xf]
  %v29 = vld [vmem:[%s2 + $0x18] sm:$0xf]
  %v30 = vld [vmem:[%s2 + $0x1c] sm:$0xf]
  %v31 = vld [vmem:[%s2 + $0x20] sm:$0xf]
  %v32 = vld [vmem:[%s2 + $0x24] sm:$0xf]
  %v33 = vld [vmem:[%s2 + $0x28] sm:$0xf]
  %v34 = vld [vmem:[%s2 + $0x2c] sm:$0xf]
  %v35 = vld [vmem:[%s2 + $0x30] sm:$0xf]
  %v36 = vld [vmem:[%s2 + $0x34] sm:$0xf]
  %v37 = vld [vmem:[%s2 + $0x38] sm:$0xf]
  %v38 = vld [vmem:[%s2 + $0x3c] sm:$0xf]
  %v41 = vunpack.c.l.b16 %v21
  %v42 = vunpack.c.l.b16 %v22
  %v43 = vpack.c.b16 %v42, %v41
  %v61 = vunpack.c.l.b16 %v23
  %v62 = vunpack.c.l.b16 %v24
  %v63 = vunpack.c.l.b16 %v25
  %v64 = vunpack.c.l.b16 %v26
  %v65 = vunpack.c.l.b16 %v27
  %v66 = vunpack.c.l.b16 %v28
  %v67 = vunpack.c.l.b16 %v29
  %v68 = vunpack.c.l.b16 %v30
  %v69 = vunpack.c.l.b16 %v31
  %v70 = vunpack.c.l.b16 %v32
  %v71 = vunpack.c.l.b16 %v33
  %v72 = vunpack.c.l.b16 %v34
  %v73 = vunpack.c.l.b16 %v35
  %v74 = vunpack.c.l.b16 %v36
  %v75 = vunpack.c.l.b16 %v37
  %v76 = vunpack.c.l.b16 %v38
  %v77 = vpack.c.b16 %v62, %v61
  %v78 = vpack.c.b16 %v64, %v63
  %v79 = vpack.c.b16 %v66, %v65
  %v80 = vpack.c.b16 %v68, %v67
  %v81 = vpack.c.b16 %v70, %v69
  %v82 = vpack.c.b16 %v72, %v71
  %v83 = vpack.c.b16 %v74, %v73
  %v84 = vpack.c.b16 %v76, %v75
  %93 = vmatprep.subr.bf16.mxu0 0
  %94 = vmatpush1.bf16.msra.mxu0 %v77
  %95 = vmatprep.subr.bf16.mxu0 0
  %96 = vmatpush1.bf16.msra.mxu0 %v78
  %97 = vmatprep.subr.bf16.mxu0 0
  %98 = vmatpush1.bf16.msra.mxu0 %v79
  %99 = vmatprep.subr.bf16.mxu0 0
  %100 = vmatpush1.bf16.msra.mxu0 %v80
  %101 = vmatprep.subr.bf16.mxu0 0
  %102 = vmatpush1.bf16.msra.mxu0 %v81
  %103 = vmatprep.subr.bf16.mxu0 0
  %104 = vmatpush1.bf16.msra.mxu0 %v82
  %105 = vmatprep.subr.bf16.mxu0 0
  %106 = vmatpush1.bf16.msra.mxu0 %v83
  %107 = vmatprep.subr.bf16.mxu0 0
  %108 = vmatpush1.bf16.msra.mxu0 %v84
  %109 = vmatprep.subr.bf16.mxu0 0
  %110 = vmatpush1.bf16.msra.mxu0 0
  %111 = vmatprep.subr.bf16.mxu0 0
  %112 = vmatpush1.bf16.msra.mxu0 0
  %113 = vmatprep.subr.bf16.mxu0 0
  %114 = vmatpush1.bf16.msra.mxu0 0
  %115 = vmatprep.subr.bf16.mxu0 0
  %116 = vmatpush1.bf16.msra.mxu0 0
  %117 = vmatprep.subr.bf16.mxu0 0
  %118 = vmatpush1.bf16.msra.mxu0 0
  %119 = vmatprep.subr.bf16.mxu0 0
  %120 = vmatpush1.bf16.msra.mxu0 0
  %121 = vmatprep.subr.bf16.mxu0 0
  %122 = vmatpush1.bf16.msra.mxu0 0
  %123 = vmatprep.subr.bf16.mxu0 0
  %124 = vmatpush1.bf16.msra.mxu0 0
  %125 = vmatprep.mubr.bf16.mxu0 0
  %126 = vmatmul.mubr.bf16.gmra.mrb[0].mxu0 %v43
  %v127 = vpop.f32.mrb[0].mxu0
  %v128 = vadd.f32 0.0, %v127
  %v129 = vpop.f32.mrb[0].mxu0
  %v130 = vpop.f32.mrb[0].mxu0
  %v131 = vadd.f32 0.0, %v130
  %v132 = vpop.f32.mrb[0].mxu0
  %133 = vdwg.mxu0
  %v134 = vlaneseq
  %v135 = vshrl.u32 %v134, 7
  %v136 = vsub.s32 0, %v135
  %v137 = vrot.slane %v20, %v136
  %vm138 = vcmask 130048
  %v140 = vsel %vm138, %v18, 0
  %v143 = vsel %vm138, %v19, 0
  %145 = vmatprep.subr.mxu0 0.0
  %146 = vmatpush1.msra.mxu0 %v128
  %147 = vmatprep.subr.mxu0 0.0
  %148 = vmatpush1.msra.mxu0 %v131
  %149 = vmatprep.subr.mxu0 0.0
  %150 = vmatpush1.msra.mxu0 0.0
  %151 = vmatprep.subr.mxu0 0.0
  %152 = vmatpush1.msra.mxu0 0.0
  %153 = vmatprep.subr.mxu0 0.0
  %154 = vmatpush1.msra.mxu0 0.0
  %155 = vmatprep.subr.mxu0 0.0
  %156 = vmatpush1.msra.mxu0 0.0
  %157 = vmatprep.subr.mxu0 0.0
  %158 = vmatpush1.msra.mxu0 0.0
  %159 = vmatprep.subr.mxu0 0.0
  %160 = vmatpush1.msra.mxu0 0.0
  %161 = vmatprep.subr.mxu0 0.0
  %162 = vmatpush1.msra.mxu0 0.0
  %163 = vmatprep.subr.mxu0 0.0
  %164 = vmatpush1.msra.mxu0 0.0
  %165 = vmatprep.subr.mxu0 0.0
  %166 = vmatpush1.msra.mxu0 0.0
  %167 = vmatprep.subr.mxu0 0.0
  %168 = vmatpush1.msra.mxu0 0.0
  %169 = vmatprep.subr.mxu0 0.0
  %170 = vmatpush1.msra.mxu0 0.0
  %171 = vmatprep.subr.mxu0 0.0
  %172 = vmatpush1.msra.mxu0 0.0
  %173 = vmatprep.subr.mxu0 0.0
  %174 = vmatpush1.msra.mxu0 0.0
  %175 = vmatprep.subr.mxu0 0.0
  %176 = vmatpush1.msra.mxu0 0.0
  %177 = vmatprep.subr.mxu0 0.0
  %178 = vmatpush1.msra.mxu0 0.0
  %179 = vmatprep.subr.mxu0 0.0
  %180 = vmatpush1.msra.mxu0 0.0
  %181 = vmatprep.subr.mxu0 0.0
  %182 = vmatpush1.msra.mxu0 0.0
  %183 = vmatprep.subr.mxu0 0.0
  %184 = vmatpush1.msra.mxu0 0.0
  %185 = vmatprep.subr.mxu0 0.0
  %186 = vmatpush1.msra.mxu0 0.0
  %187 = vmatprep.subr.mxu0 0.0
  %188 = vmatpush1.msra.mxu0 0.0
  %189 = vmatprep.subr.mxu0 0.0
  %190 = vmatpush1.msra.mxu0 0.0
  %191 = vmatprep.subr.mxu0 0.0
  %192 = vmatpush1.msra.mxu0 0.0
  %193 = vmatprep.subr.mxu0 0.0
  %194 = vmatpush1.msra.mxu0 0.0
  %195 = vmatprep.subr.mxu0 0.0
  %196 = vmatpush1.msra.mxu0 0.0
  %197 = vmatprep.subr.mxu0 0.0
  %198 = vmatpush1.msra.mxu0 0.0
  %199 = vmatprep.subr.mxu0 0.0
  %200 = vmatpush1.msra.mxu0 0.0
  %201 = vmatprep.subr.mxu0 0.0
  %202 = vmatpush1.msra.mxu0 0.0
  %203 = vmatprep.subr.mxu0 0.0
  %204 = vmatpush1.msra.mxu0 0.0
  %205 = vmatprep.subr.mxu0 0.0
  %206 = vmatpush1.msra.mxu0 0.0
  %207 = vmatprep.subr.mxu0 0.0
  %208 = vmatpush1.msra.mxu0 0.0
  %209 = vmatprep.mubr.f32.mxu0 0.0
  %210 = vmatmul.mubr.f32.gmra.mrb[0].mxu0 %v140
  %v211 = vpop.f32.mrb[0].mxu0
  %v212 = vadd.f32 %v137, %v211
  %v213 = vpop.f32.mrb[0].mxu0
  %214 = vmatprep.mubr.f32.mxu0 0.0
  %215 = vmatmul.mubr.f32.gmra.mrb[0].mxu0 %v143
  %v216 = vpop.f32.mrb[0].mxu0
  %v217 = vadd.f32 %v137, %v216
  %v218 = vpop.f32.mrb[0].mxu0
  %219 = vdwg.mxu0
  %v220 = vmax.f32 %v212, 0.0
  %v221 = vmax.f32 %v217, 0.0
  %v222 = vpack.c.bf16 %v221, %v220
  %s223 = scalar_lea.vmem %s2, 64
  %v224 = vld [vmem:[%s223] sm:$0xf]
  %v225 = vld [vmem:[%s223 + $0x4] sm:$0xf]
  %v226 = vld [vmem:[%s223 + $0x8] sm:$0xf]
  %v227 = vld [vmem:[%s223 + $0xc] sm:$0xf]
  %v228 = vld [vmem:[%s223 + $0x10] sm:$0xf]
  %v229 = vld [vmem:[%s223 + $0x14] sm:$0xf]
  %v230 = vld [vmem:[%s223 + $0x18] sm:$0xf]
  %v231 = vld [vmem:[%s223 + $0x1c] sm:$0xf]
  %v232 = vld [vmem:[%s223 + $0x20] sm:$0xf]
  %v233 = vld [vmem:[%s223 + $0x24] sm:$0xf]
  %v234 = vld [vmem:[%s223 + $0x28] sm:$0xf]
  %v235 = vld [vmem:[%s223 + $0x2c] sm:$0xf]
  %v236 = vld [vmem:[%s223 + $0x30] sm:$0xf]
  %v237 = vld [vmem:[%s223 + $0x34] sm:$0xf]
  %v238 = vld [vmem:[%s223 + $0x38] sm:$0xf]
  %v239 = vld [vmem:[%s223 + $0x3c] sm:$0xf]
  %v256 = vunpack.c.l.b16 %v224
  %v257 = vunpack.c.l.b16 %v225
  %v258 = vunpack.c.l.b16 %v226
  %v259 = vunpack.c.l.b16 %v227
  %v260 = vunpack.c.l.b16 %v228
  %v261 = vunpack.c.l.b16 %v229
  %v262 = vunpack.c.l.b16 %v230
  %v263 = vunpack.c.l.b16 %v231
  %v264 = vunpack.c.l.b16 %v232
  %v265 = vunpack.c.l.b16 %v233
  %v266 = vunpack.c.l.b16 %v234
  %v267 = vunpack.c.l.b16 %v235
  %v268 = vunpack.c.l.b16 %v236
  %v269 = vunpack.c.l.b16 %v237
  %v270 = vunpack.c.l.b16 %v238
  %v271 = vunpack.c.l.b16 %v239
  %v272 = vpack.c.b16 %v257, %v256
  %v273 = vpack.c.b16 %v259, %v258
  %v274 = vpack.c.b16 %v261, %v260
  %v275 = vpack.c.b16 %v263, %v262
  %v276 = vpack.c.b16 %v265, %v264
  %v277 = vpack.c.b16 %v267, %v266
  %v278 = vpack.c.b16 %v269, %v268
  %v279 = vpack.c.b16 %v271, %v270
  %288 = vmatprep.subr.bf16.mxu0 0
  %289 = vmatpush1.bf16.msra.mxu0 %v272
  %290 = vmatprep.subr.bf16.mxu0 0
  %291 = vmatpush1.bf16.msra.mxu0 %v273
  %292 = vmatprep.subr.bf16.mxu0 0
  %293 = vmatpush1.bf16.msra.mxu0 %v274
  %294 = vmatprep.subr.bf16.mxu0 0
  %295 = vmatpush1.bf16.msra.mxu0 %v275
  %296 = vmatprep.subr.bf16.mxu0 0
  %297 = vmatpush1.bf16.msra.mxu0 %v276
  %298 = vmatprep.subr.bf16.mxu0 0
  %299 = vmatpush1.bf16.msra.mxu0 %v277
  %300 = vmatprep.subr.bf16.mxu0 0
  %301 = vmatpush1.bf16.msra.mxu0 %v278
  %302 = vmatprep.subr.bf16.mxu0 0
  %303 = vmatpush1.bf16.msra.mxu0 %v279
  %304 = vmatprep.subr.bf16.mxu0 0
  %305 = vmatpush1.bf16.msra.mxu0 0
  %306 = vmatprep.subr.bf16.mxu0 0
  %307 = vmatpush1.bf16.msra.mxu0 0
  %308 = vmatprep.subr.bf16.mxu0 0
  %309 = vmatpush1.bf16.msra.mxu0 0
  %310 = vmatprep.subr.bf16.mxu0 0
  %311 = vmatpush1.bf16.msra.mxu0 0
  %312 = vmatprep.subr.bf16.mxu0 0
  %313 = vmatpush1.bf16.msra.mxu0 0
  %314 = vmatprep.subr.bf16.mxu0 0
  %315 = vmatpush1.bf16.msra.mxu0 0
  %316 = vmatprep.subr.bf16.mxu0 0
  %317 = vmatpush1.bf16.msra.mxu0 0
  %318 = vmatprep.subr.bf16.mxu0 0
  %319 = vmatpush1.bf16.msra.mxu0 0
  %320 = vmatprep.mubr.bf16.mxu0 0
  %321 = vmatmul.mubr.bf16.gmra.mrb[0].mxu0 %v222
  %v322 = vpop.f32.mrb[0].mxu0
  %v323 = vadd.f32 0.0, %v322
  %v324 = vpop.f32.mrb[0].mxu0
  %v325 = vpop.f32.mrb[0].mxu0
  %v326 = vadd.f32 0.0, %v325
  %v327 = vpop.f32.mrb[0].mxu0
  %328 = vdwg.mxu0
  %v329 = vlaneseq
  %v330 = vshrl.u32 %v329, 7
  %v331 = vsub.s32 1, %v330
  %v332 = vrot.slane %v20, %v331
  %333 = vmatprep.subr.mxu0 0.0
  %334 = vmatpush1.msra.mxu0 %v323
  %335 = vmatprep.subr.mxu0 0.0
  %336 = vmatpush1.msra.mxu0 %v326
  %337 = vmatprep.subr.mxu0 0.0
  %338 = vmatpush1.msra.mxu0 0.0
  %339 = vmatprep.subr.mxu0 0.0
  %340 = vmatpush1.msra.mxu0 0.0
  %341 = vmatprep.subr.mxu0 0.0
  %342 = vmatpush1.msra.mxu0 0.0
  %343 = vmatprep.subr.mxu0 0.0
  %344 = vmatpush1.msra.mxu0 0.0
  %345 = vmatprep.subr.mxu0 0.0
  %346 = vmatpush1.msra.mxu0 0.0
  %347 = vmatprep.subr.mxu0 0.0
  %348 = vmatpush1.msra.mxu0 0.0
  %349 = vmatprep.subr.mxu0 0.0
  %350 = vmatpush1.msra.mxu0 0.0
  %351 = vmatprep.subr.mxu0 0.0
  %352 = vmatpush1.msra.mxu0 0.0
  %353 = vmatprep.subr.mxu0 0.0
  %354 = vmatpush1.msra.mxu0 0.0
  %355 = vmatprep.subr.mxu0 0.0
  %356 = vmatpush1.msra.mxu0 0.0
  %357 = vmatprep.subr.mxu0 0.0
  %358 = vmatpush1.msra.mxu0 0.0
  %359 = vmatprep.subr.mxu0 0.0
  %360 = vmatpush1.msra.mxu0 0.0
  %361 = vmatprep.subr.mxu0 0.0
  %362 = vmatpush1.msra.mxu0 0.0
  %363 = vmatprep.subr.mxu0 0.0
  %364 = vmatpush1.msra.mxu0 0.0
  %365 = vmatprep.subr.mxu0 0.0
  %366 = vmatpush1.msra.mxu0 0.0
  %367 = vmatprep.subr.mxu0 0.0
  %368 = vmatpush1.msra.mxu0 0.0
  %369 = vmatprep.subr.mxu0 0.0
  %370 = vmatpush1.msra.mxu0 0.0
  %371 = vmatprep.subr.mxu0 0.0
  %372 = vmatpush1.msra.mxu0 0.0
  %373 = vmatprep.subr.mxu0 0.0
  %374 = vmatpush1.msra.mxu0 0.0
  %375 = vmatprep.subr.mxu0 0.0
  %376 = vmatpush1.msra.mxu0 0.0
  %377 = vmatprep.subr.mxu0 0.0
  %378 = vmatpush1.msra.mxu0 0.0
  %379 = vmatprep.subr.mxu0 0.0
  %380 = vmatpush1.msra.mxu0 0.0
  %381 = vmatprep.subr.mxu0 0.0
  %382 = vmatpush1.msra.mxu0 0.0
  %383 = vmatprep.subr.mxu0 0.0
  %384 = vmatpush1.msra.mxu0 0.0
  %385 = vmatprep.subr.mxu0 0.0
  %386 = vmatpush1.msra.mxu0 0.0
  %387 = vmatprep.subr.mxu0 0.0
  %388 = vmatpush1.msra.mxu0 0.0
  %389 = vmatprep.subr.mxu0 0.0
  %390 = vmatpush1.msra.mxu0 0.0
  %391 = vmatprep.subr.mxu0 0.0
  %392 = vmatpush1.msra.mxu0 0.0
  %393 = vmatprep.subr.mxu0 0.0
  %394 = vmatpush1.msra.mxu0 0.0
  %395 = vmatprep.subr.mxu0 0.0
  %396 = vmatpush1.msra.mxu0 0.0
  %397 = vmatprep.mubr.f32.mxu0 0.0
  %398 = vmatmul.mubr.f32.gmra.mrb[0].mxu0 %v140
  %v399 = vpop.f32.mrb[0].mxu0
  %v400 = vadd.f32 %v332, %v399
  %v401 = vpop.f32.mrb[0].mxu0
  %402 = vmatprep.mubr.f32.mxu0 0.0
  %403 = vmatmul.mubr.f32.gmra.mrb[0].mxu0 %v143
  %v404 = vpop.f32.mrb[0].mxu0
  %v405 = vadd.f32 %v332, %v404
  %v406 = vpop.f32.mrb[0].mxu0
  %407 = vdwg.mxu0
  %v408 = vmax.f32 %v400, 0.0
  %v409 = vmax.f32 %v405, 0.0
  %v410 = vpack.c.bf16 %v409, %v408
  %s411 = scalar_lea.vmem %s2, 128
  %v412 = vld [vmem:[%s411] sm:$0xf]
  %v413 = vld [vmem:[%s411 + $0x4] sm:$0xf]
  %v414 = vld [vmem:[%s411 + $0x8] sm:$0xf]
  %v415 = vld [vmem:[%s411 + $0xc] sm:$0xf]
  %v416 = vld [vmem:[%s411 + $0x10] sm:$0xf]
  %v417 = vld [vmem:[%s411 + $0x14] sm:$0xf]
  %v418 = vld [vmem:[%s411 + $0x18] sm:$0xf]
  %v419 = vld [vmem:[%s411 + $0x1c] sm:$0xf]
  %v420 = vld [vmem:[%s411 + $0x20] sm:$0xf]
  %v421 = vld [vmem:[%s411 + $0x24] sm:$0xf]
  %v422 = vld [vmem:[%s411 + $0x28] sm:$0xf]
  %v423 = vld [vmem:[%s411 + $0x2c] sm:$0xf]
  %v424 = vld [vmem:[%s411 + $0x30] sm:$0xf]
  %v425 = vld [vmem:[%s411 + $0x34] sm:$0xf]
  %v426 = vld [vmem:[%s411 + $0x38] sm:$0xf]
  %v427 = vld [vmem:[%s411 + $0x3c] sm:$0xf]
  %v444 = vunpack.c.l.b16 %v412
  %v445 = vunpack.c.l.b16 %v413
  %v446 = vunpack.c.l.b16 %v414
  %v447 = vunpack.c.l.b16 %v415
  %v448 = vunpack.c.l.b16 %v416
  %v449 = vunpack.c.l.b16 %v417
  %v450 = vunpack.c.l.b16 %v418
  %v451 = vunpack.c.l.b16 %v419
  %v452 = vunpack.c.l.b16 %v420
  %v453 = vunpack.c.l.b16 %v421
  %v454 = vunpack.c.l.b16 %v422
  %v455 = vunpack.c.l.b16 %v423
  %v456 = vunpack.c.l.b16 %v424
  %v457 = vunpack.c.l.b16 %v425
  %v458 = vunpack.c.l.b16 %v426
  %v459 = vunpack.c.l.b16 %v427
  %v460 = vpack.c.b16 %v445, %v444
  %v461 = vpack.c.b16 %v447, %v446
  %v462 = vpack.c.b16 %v449, %v448
  %v463 = vpack.c.b16 %v451, %v450
  %v464 = vpack.c.b16 %v453, %v452
  %v465 = vpack.c.b16 %v455, %v454
  %v466 = vpack.c.b16 %v457, %v456
  %v467 = vpack.c.b16 %v459, %v458
  %476 = vmatprep.subr.bf16.mxu0 0
  %477 = vmatpush1.bf16.msra.mxu0 %v460
  %478 = vmatprep.subr.bf16.mxu0 0
  %479 = vmatpush1.bf16.msra.mxu0 %v461
  %480 = vmatprep.subr.bf16.mxu0 0
  %481 = vmatpush1.bf16.msra.mxu0 %v462
  %482 = vmatprep.subr.bf16.mxu0 0
  %483 = vmatpush1.bf16.msra.mxu0 %v463
  %484 = vmatprep.subr.bf16.mxu0 0
  %485 = vmatpush1.bf16.msra.mxu0 %v464
  %486 = vmatprep.subr.bf16.mxu0 0
  %487 = vmatpush1.bf16.msra.mxu0 %v465
  %488 = vmatprep.subr.bf16.mxu0 0
  %489 = vmatpush1.bf16.msra.mxu0 %v466
  %490 = vmatprep.subr.bf16.mxu0 0
  %491 = vmatpush1.bf16.msra.mxu0 %v467
  %492 = vmatprep.subr.bf16.mxu0 0
  %493 = vmatpush1.bf16.msra.mxu0 0
  %494 = vmatprep.subr.bf16.mxu0 0
  %495 = vmatpush1.bf16.msra.mxu0 0
  %496 = vmatprep.subr.bf16.mxu0 0
  %497 = vmatpush1.bf16.msra.mxu0 0
  %498 = vmatprep.subr.bf16.mxu0 0
  %499 = vmatpush1.bf16.msra.mxu0 0
  %500 = vmatprep.subr.bf16.mxu0 0
  %501 = vmatpush1.bf16.msra.mxu0 0
  %502 = vmatprep.subr.bf16.mxu0 0
  %503 = vmatpush1.bf16.msra.mxu0 0
  %504 = vmatprep.subr.bf16.mxu0 0
  %505 = vmatpush1.bf16.msra.mxu0 0
  %506 = vmatprep.subr.bf16.mxu0 0
  %507 = vmatpush1.bf16.msra.mxu0 0
  %508 = vmatprep.mubr.bf16.mxu0 0
  %509 = vmatmul.mubr.bf16.gmra.mrb[0].mxu0 %v410
  %v510 = vpop.f32.mrb[0].mxu0
  %v511 = vadd.f32 0.0, %v510
  %v512 = vpop.f32.mrb[0].mxu0
  %v513 = vpop.f32.mrb[0].mxu0
  %v514 = vadd.f32 0.0, %v513
  %v515 = vpop.f32.mrb[0].mxu0
  %516 = vdwg.mxu0
  %v517 = vlaneseq
  %v518 = vshrl.u32 %v517, 7
  %v519 = vsub.s32 2, %v518
  %v520 = vrot.slane %v20, %v519
  %521 = vmatprep.subr.mxu0 0.0
  %522 = vmatpush1.msra.mxu0 %v511
  %523 = vmatprep.subr.mxu0 0.0
  %524 = vmatpush1.msra.mxu0 %v514
  %525 = vmatprep.subr.mxu0 0.0
  %526 = vmatpush1.msra.mxu0 0.0
  %527 = vmatprep.subr.mxu0 0.0
  %528 = vmatpush1.msra.mxu0 0.0
  %529 = vmatprep.subr.mxu0 0.0
  %530 = vmatpush1.msra.mxu0 0.0
  %531 = vmatprep.subr.mxu0 0.0
  %532 = vmatpush1.msra.mxu0 0.0
  %533 = vmatprep.subr.mxu0 0.0
  %534 = vmatpush1.msra.mxu0 0.0
  %535 = vmatprep.subr.mxu0 0.0
  %536 = vmatpush1.msra.mxu0 0.0
  %537 = vmatprep.subr.mxu0 0.0
  %538 = vmatpush1.msra.mxu0 0.0
  %539 = vmatprep.subr.mxu0 0.0
  %540 = vmatpush1.msra.mxu0 0.0
  %541 = vmatprep.subr.mxu0 0.0
  %542 = vmatpush1.msra.mxu0 0.0
  %543 = vmatprep.subr.mxu0 0.0
  %544 = vmatpush1.msra.mxu0 0.0
  %545 = vmatprep.subr.mxu0 0.0
  %546 = vmatpush1.msra.mxu0 0.0
  %547 = vmatprep.subr.mxu0 0.0
  %548 = vmatpush1.msra.mxu0 0.0
  %549 = vmatprep.subr.mxu0 0.0
  %550 = vmatpush1.msra.mxu0 0.0
  %551 = vmatprep.subr.mxu0 0.0
  %552 = vmatpush1.msra.mxu0 0.0
  %553 = vmatprep.subr.mxu0 0.0
  %554 = vmatpush1.msra.mxu0 0.0
  %555 = vmatprep.subr.mxu0 0.0
  %556 = vmatpush1.msra.mxu0 0.0
  %557 = vmatprep.subr.mxu0 0.0
  %558 = vmatpush1.msra.mxu0 0.0
  %559 = vmatprep.subr.mxu0 0.0
  %560 = vmatpush1.msra.mxu0 0.0
  %561 = vmatprep.subr.mxu0 0.0
  %562 = vmatpush1.msra.mxu0 0.0
  %563 = vmatprep.subr.mxu0 0.0
  %564 = vmatpush1.msra.mxu0 0.0
  %565 = vmatprep.subr.mxu0 0.0
  %566 = vmatpush1.msra.mxu0 0.0
  %567 = vmatprep.subr.mxu0 0.0
  %568 = vmatpush1.msra.mxu0 0.0
  %569 = vmatprep.subr.mxu0 0.0
  %570 = vmatpush1.msra.mxu0 0.0
  %571 = vmatprep.subr.mxu0 0.0
  %572 = vmatpush1.msra.mxu0 0.0
  %573 = vmatprep.subr.mxu0 0.0
  %574 = vmatpush1.msra.mxu0 0.0
  %575 = vmatprep.subr.mxu0 0.0
  %576 = vmatpush1.msra.mxu0 0.0
  %577 = vmatprep.subr.mxu0 0.0
  %578 = vmatpush1.msra.mxu0 0.0
  %579 = vmatprep.subr.mxu0 0.0
  %580 = vmatpush1.msra.mxu0 0.0
  %581 = vmatprep.subr.mxu0 0.0
  %582 = vmatpush1.msra.mxu0 0.0
  %583 = vmatprep.subr.mxu0 0.0
  %584 = vmatpush1.msra.mxu0 0.0
  %585 = vmatprep.mubr.f32.mxu0 0.0
  %586 = vmatmul.mubr.f32.gmra.mrb[0].mxu0 %v140
  %v587 = vpop.f32.mrb[0].mxu0
  %v588 = vadd.f32 %v520, %v587
  %v589 = vpop.f32.mrb[0].mxu0
  %590 = vmatprep.mubr.f32.mxu0 0.0
  %591 = vmatmul.mubr.f32.gmra.mrb[0].mxu0 %v143
  %v592 = vpop.f32.mrb[0].mxu0
  %v593 = vadd.f32 %v520, %v592
  %v594 = vpop.f32.mrb[0].mxu0
  %595 = vdwg.mxu0
  %596 = vst [vmem:[%s4] sm:$0xff] %v588
  %597 = vst [vmem:[%s4 + $0x8] sm:$0xff] %v593
  // Predicated region
  $region18: #{gcn_model_forward.1} parent=0 // pred_check
    _
  $region19: #{gcn_model_forward.1} parent=0 // pred_check_branch
    %599 = sbr.rel (0) target = $region21
  $region20: #{gcn_model_forward.1} parent=0 // pred_region
    _
  $region21: #{gcn_model_forward.1} parent=0 // pred_fallthru
    _
  // Predicated region
  $region22: #{gcn_model_forward.1} parent=0 // pred_check
    _
  $region23: #{gcn_model_forward.1} parent=0 // pred_check_branch
    %601 = sbr.rel (0) target = $region25
  $region24: #{gcn_model_forward.1} parent=0 // pred_region
    _
  $region25: #{gcn_model_forward.1} parent=0 // pred_fallthru
    _

</llo_original>
